<compile_context>
chip_gen: v5e
topology: v5e:2x2
jax: 0.10.0
libtpu: 0.0.40
codegen_flags: <defaults>
</compile_context>

<pallas_src>
import jax
import jax.numpy as jnp
from jax.experimental import pallas as pl
from jax.experimental.pallas import tpu as pltpu

BN_EPS = 1e-5


# ----------------------------------------------------------------------------
# Fused kernel builder
# ----------------------------------------------------------------------------
def _piece_layout(d0, gen_dims, k):
    """Row (offset, width) pairs of layer-k's weight, matching the activation
    list order acts = [h_{k-1}, ..., h_0, x] (i.e. torch.cat([out, input]))."""
    widths = list(reversed(list(gen_dims[:k]))) + [d0]
    layout, off = [], 0
    for w in widths:
        layout.append((off, w))
        off += w
    return layout


def _make_fused_generator_kernel(d0, gen_dims, data_dim, eps=BN_EPS,
                                 compute_dtype=jnp.bfloat16):
    """Kernel ref layout (all VMEM, full blocks):
         x_ref                                   [B, d0]
         w_ref[k] for each residual layer k      [din_k, g_k]   (compute_dtype)
         wfin_ref                                [din_L, data_dim] (compute_dtype)
         vec_ref                                 [2L+1, max_w]  f32
             rows: gamma_0, beta_0, gamma_1, beta_1, ..., final_bias
         out_ref                                 [B, data_dim]
    """
    num_residual = len(gen_dims)
    layer_layouts = [_piece_layout(d0, gen_dims, k) for k in range(num_residual)]
    final_layout = _piece_layout(d0, gen_dims, num_residual)

    def kernel(*refs):
        out_ref = refs[-1]
        x_ref = refs[0]
        w_refs = refs[1:1 + num_residual]
        wfin_ref = refs[1 + num_residual]
        vec_ref = refs[2 + num_residual]

        x = x_ref[...].astype(jnp.float32)
        # Newest activation first; matches torch.cat([out, input], dim=1) ordering.
        acts = [x]

        def split_matmul(acts_list, w_ref, layout):
            # Virtual concat: slice the full weight inside the kernel with static
            # (sublane-aligned) offsets -- zero-cost views, one DMA per matrix.
            acc = None
            for a, (off, s) in zip(acts_list, layout):
                part = jnp.dot(a.astype(compute_dtype), w_ref[off:off + s, :],
                               preferred_element_type=jnp.float32)
                acc = part if acc is None else acc + part
            return acc

        for k in range(num_residual):
            g = gen_dims[k]
            # Linear (MXU, f32 accumulation).  No bias: cancelled by training-mode BN.
            z = split_matmul(acts, w_refs[k], layer_layouts[k])

            # BatchNorm1d (training mode) folded into per-column scale/shift.
            mean = jnp.mean(z, axis=0, keepdims=True)
            meansq = jnp.mean(z * z, axis=0, keepdims=True)
            var = meansq - mean * mean
            gamma = vec_ref[2 * k:2 * k + 1, 0:g]
            beta = vec_ref[2 * k + 1:2 * k + 2, 0:g]
            scale = gamma * jax.lax.rsqrt(var + eps)
            shift = beta - mean * scale
            # Normalize + affine + ReLU in one fused pass.
            h = jnp.maximum(z * scale + shift, 0.0)

            acts.insert(0, h)

        # Final Linear over the (virtual) concat [h_{L-1}, ..., h_0, x].
        out = split_matmul(acts, wfin_ref, final_layout)
        b = vec_ref[2 * num_residual:2 * num_residual + 1, 0:data_dim]
        out_ref[...] = (out + b).astype(out_ref.dtype)

    return kernel


# ----------------------------------------------------------------------------
# Wrapper
# ----------------------------------------------------------------------------
def _pack_vectors(params, data_dim, dtype=jnp.float32):
    """Stack gamma_k, beta_k (per residual layer) and the final bias into a single
    [2L+1, max_width] f32 array -> one DMA instead of ~2L+1 tiny ones."""
    widths = [p["gamma"].shape[1] for p in params["residuals"]] + [data_dim]
    max_w = max(widths)

    def pad_row(v):
        return jnp.pad(v.astype(dtype), ((0, 0), (0, max_w - v.shape[1])))

    rows = []
    for p in params["residuals"]:
        rows.append(pad_row(p["gamma"]))
        rows.append(pad_row(p["beta"]))
    rows.append(pad_row(params["final"]["b"]))
    return jnp.concatenate(rows, axis=0)


def _vmem_budget_bytes(B, d0, gen_dims, data_dim, compute_bytes):
    """VMEM budget for the fused kernel, capped at ~80% of physical VMEM."""
    feat_total = d0 + sum(gen_dims)
    act_bytes = B * feat_total * 4                       # live f32 activations
    param_bytes = 0
    dim = d0
    for g in gen_dims:
        param_bytes += dim * g * compute_bytes
        dim += g
    param_bytes += dim * data_dim * compute_bytes
    vec_bytes = (2 * len(gen_dims) + 1) * max(list(gen_dims) + [data_dim]) * 4
    out_bytes = B * data_dim * 4
    est = 3 * act_bytes + 2 * param_bytes + 2 * (vec_bytes + out_bytes) + (4 << 20)

    try:
        cap = int(0.8 * pltpu.get_tpu_info().vmem_capacity_bytes)
    except Exception:
        cap = int(0.8 * (64 << 20))  # conservative: v7x physical VMEM
    return int(min(max(est, 8 << 20), cap))


def generator_forward(params, x, *, compute_dtype=jnp.bfloat16):
    """Forward pass of the Generator as one fused Pallas call."""
    B, d0 = x.shape
    gen_dims = tuple(p["w"].shape[1] for p in params["residuals"])
    data_dim = params["final"]["w"].shape[1]

    inputs = [x]
    for p in params["residuals"]:
        inputs.append(p["w"].astype(compute_dtype))       # full matrix; sliced in-kernel
    inputs.append(params["final"]["w"].astype(compute_dtype))
    inputs.append(_pack_vectors(params, data_dim))         # gammas/betas/final bias

    vmem_spec = pl.BlockSpec(memory_space=pltpu.MemorySpace.VMEM)
    kernel = _make_fused_generator_kernel(d0, gen_dims, data_dim,
                                          compute_dtype=compute_dtype)
    compute_bytes = jnp.dtype(compute_dtype).itemsize

    return pl.pallas_call(
        kernel,
        out_shape=jax.ShapeDtypeStruct((B, data_dim), x.dtype),
        in_specs=[vmem_spec] * len(inputs),
        out_specs=vmem_spec,
        compiler_params=pltpu.CompilerParams(
            vmem_limit_bytes=_vmem_budget_bytes(B, d0, gen_dims, data_dim,
                                                compute_bytes)
        ),
    )(*inputs)


# ----------------------------------------------------------------------------
# Parameter construction (deterministic, mirrors PyTorch default inits)
# ----------------------------------------------------------------------------
def init_generator_params(key, embedding_dim, gen_dims, data_dim, dtype=jnp.float32):
    """Linear: U(-1/sqrt(fan_in), 1/sqrt(fan_in)); BatchNorm: gamma=1, beta=0."""
    params = {"residuals": []}
    dim = embedding_dim
    for item in list(gen_dims):
        key, kw, kb = jax.random.split(key, 3)
        bound = 1.0 / jnp.sqrt(jnp.float32(dim))
        w = jax.random.uniform(kw, (dim, item), dtype, -bound, bound)
        b = jax.random.uniform(kb, (1, item), dtype, -bound, bound)
        gamma = jnp.ones((1, item), dtype)
        beta = jnp.zeros((1, item), dtype)
        params["residuals"].append({"w": w, "b": b, "gamma": gamma, "beta": beta})
        dim += item
    key, kw, kb = jax.random.split(key, 3)
    bound = 1.0 / jnp.sqrt(jnp.float32(dim))
    params["final"] = {
        "w": jax.random.uniform(kw, (dim, data_dim), dtype, -bound, bound),
        "b": jax.random.uniform(kb, (1, data_dim), dtype, -bound, bound),
    }
    return params


# ----------------------------------------------------------------------------
# Pure-JAX reference (concat form, PyTorch semantics incl. residual bias)
# ----------------------------------------------------------------------------
def generator_forward_ref(params, x, compute_dtype=None):
    """If compute_dtype is given, weights/activations are cast at the matmul
    boundary exactly like the kernel's bf16 path (f32 accumulation)."""
    def cast(a):
        return a.astype(compute_dtype) if compute_dtype is not None else a

    x = x.astype(jnp.float32)
    for p in params["residuals"]:
        h = jnp.dot(cast(x), cast(p["w"]),
                    preferred_element_type=jnp.float32) + p["b"]
        mean = jnp.mean(h, axis=0, keepdims=True)
        var = jnp.mean((h - mean) ** 2, axis=0, keepdims=True)
        h = (h - mean) * jax.lax.rsqrt(var + BN_EPS)
        h = h * p["gamma"] + p["beta"]
        h = jnp.maximum(h, 0.0)
        x = jnp.concatenate([h, x], axis=1)
    p = params["final"]
    return jnp.dot(cast(x), cast(p["w"]),
                   preferred_element_type=jnp.float32) + p["b"]


if __name__ == "__main__":
    # Small shapes consistent with the module: embedding_dim=32, gen_dims=(64, 64),
    # data_dim=16, batch=8.  (Production configs should use 128-multiple widths
    # and B >= 128 for lane/MXU efficiency -- see comments above.)
    B = 8
    embedding_dim = 32
    gen_dims = (64, 64)
    data_dim = 16

    key = jax.random.PRNGKey(0)
    key, kx = jax.random.split(key)
    params = init_generator_params(key, embedding_dim, gen_dims, data_dim)
    x = jax.random.normal(kx, (B, embedding_dim), jnp.float32)

    # 1) f32 MXU path: bit-level check against the PyTorch-style reference
    #    (also proves the dropped residual biases are a mathematical no-op).
    fwd_f32 = jax.jit(lambda p, v: generator_forward(p, v, compute_dtype=jnp.float32))
    out_f32 = jax.block_until_ready(fwd_f32(params, x))
    ref_f32 = generator_forward_ref(params, x)
    assert out_f32.shape == (B, data_dim), out_f32.shape
    assert jnp.allclose(out_f32, ref_f32, atol=1e-4, rtol=1e-4), "f32 path mismatch"

    # 2) bf16 MXU path (default, fastest): check against a matched-cast reference.
    fwd_bf16 = jax.jit(generator_forward)
    out_bf16 = jax.block_until_ready(fwd_bf16(params, x))
    ref_bf16 = generator_forward_ref(params, x, compute_dtype=jnp.bfloat16)
    assert out_bf16.shape == (B, data_dim), out_bf16.shape
    assert jnp.allclose(out_bf16, ref_bf16, atol=2e-3, rtol=2e-3), "bf16 path mismatch"

    print("KERNEL_OK")
</pallas_src>

<mosaic_0001>
module attributes {stable_mosaic.version = 11 : i64} {
  func.func @kernel(%arg0: memref<8x32xf32, #tpu.memory_space<vmem>>, %arg1: memref<32x64xf32, #tpu.memory_space<vmem>>, %arg2: memref<96x64xf32, #tpu.memory_space<vmem>>, %arg3: memref<160x16xf32, #tpu.memory_space<vmem>>, %arg4: memref<5x64xf32, #tpu.memory_space<vmem>>, %arg5: memref<8x16xf32, #tpu.memory_space<vmem>>) attributes {dimension_semantics = [], scalar_prefetch = 0 : i64, scratch_operands = 0 : i64, tpu.core_type = #tpu.core_type<tc>} {
    %c0 = arith.constant 0 : index
    %c0_0 = arith.constant 0 : index
    %0 = vector.load %arg0[%c0, %c0_0] : memref<8x32xf32, #tpu.memory_space<vmem>>, vector<8x32xf32>
    %c0_1 = arith.constant 0 : index
    %c0_2 = arith.constant 0 : index
    %1 = vector.load %arg1[%c0_1, %c0_2] : memref<32x64xf32, #tpu.memory_space<vmem>>, vector<32x64xf32>
    %cst = arith.constant dense<0.000000e+00> : vector<8x64xf32>
    %2 = tpu.matmul %0, %1, %cst {dimension_numbers = #tpu.dot_dimension_numbers<[1], [0], [0], [1], [0, 0, 1, 1], [], []>} : vector<8x32xf32>, vector<32x64xf32>, vector<8x64xf32> -> vector<8x64xf32>
    %cst_3 = arith.constant dense<0.000000e+00> : vector<64xf32>
    %3 = vector.multi_reduction <add>, %2, %cst_3 [0] : vector<8x64xf32> to vector<64xf32>
    %4 = vector.shape_cast %3 : vector<64xf32> to vector<1x64xf32>
    %cst_4 = arith.constant 8.000000e+00 : f32
    %5 = vector.broadcast %cst_4 : f32 to vector<1x64xf32>
    %6 = arith.divf %4, %5 : vector<1x64xf32>
    %7 = arith.mulf %2, %2 : vector<8x64xf32>
    %cst_5 = arith.constant dense<0.000000e+00> : vector<64xf32>
    %8 = vector.multi_reduction <add>, %7, %cst_5 [0] : vector<8x64xf32> to vector<64xf32>
    %9 = vector.shape_cast %8 : vector<64xf32> to vector<1x64xf32>
    %cst_6 = arith.constant 8.000000e+00 : f32
    %10 = vector.broadcast %cst_6 : f32 to vector<1x64xf32>
    %11 = arith.divf %9, %10 : vector<1x64xf32>
    %12 = arith.mulf %6, %6 : vector<1x64xf32>
    %13 = arith.subf %11, %12 : vector<1x64xf32>
    %c0_7 = arith.constant 0 : index
    %c0_8 = arith.constant 0 : index
    %14 = vector.load %arg4[%c0_7, %c0_8] : memref<5x64xf32, #tpu.memory_space<vmem>>, vector<1x64xf32>
    %c1 = arith.constant 1 : index
    %c0_9 = arith.constant 0 : index
    %15 = vector.load %arg4[%c1, %c0_9] : memref<5x64xf32, #tpu.memory_space<vmem>>, vector<1x64xf32>
    %cst_10 = arith.constant 9.99999974E-6 : f32
    %16 = vector.broadcast %cst_10 : f32 to vector<1x64xf32>
    %17 = arith.addf %13, %16 : vector<1x64xf32>
    %18 = math.rsqrt %17 : vector<1x64xf32>
    %19 = arith.mulf %14, %18 : vector<1x64xf32>
    %20 = arith.mulf %6, %19 : vector<1x64xf32>
    %21 = arith.subf %15, %20 : vector<1x64xf32>
    %22 = vector.broadcast %19 : vector<1x64xf32> to vector<8x64xf32>
    %23 = arith.mulf %2, %22 : vector<8x64xf32>
    %24 = vector.broadcast %21 : vector<1x64xf32> to vector<8x64xf32>
    %25 = arith.addf %23, %24 : vector<8x64xf32>
    %cst_11 = arith.constant 0.000000e+00 : f32
    %26 = vector.broadcast %cst_11 : f32 to vector<8x64xf32>
    %27 = arith.maximumf %25, %26 : vector<8x64xf32>
    %c0_12 = arith.constant 0 : index
    %c0_13 = arith.constant 0 : index
    %28 = vector.load %arg2[%c0_12, %c0_13] : memref<96x64xf32, #tpu.memory_space<vmem>>, vector<64x64xf32>
    %cst_14 = arith.constant dense<0.000000e+00> : vector<8x64xf32>
    %29 = tpu.matmul %27, %28, %cst_14 {dimension_numbers = #tpu.dot_dimension_numbers<[1], [0], [0], [1], [0, 0, 1, 1], [], []>} : vector<8x64xf32>, vector<64x64xf32>, vector<8x64xf32> -> vector<8x64xf32>
    %c64 = arith.constant 64 : index
    %c0_15 = arith.constant 0 : index
    %30 = vector.load %arg2[%c64, %c0_15] : memref<96x64xf32, #tpu.memory_space<vmem>>, vector<32x64xf32>
    %cst_16 = arith.constant dense<0.000000e+00> : vector<8x64xf32>
    %31 = tpu.matmul %0, %30, %cst_16 {dimension_numbers = #tpu.dot_dimension_numbers<[1], [0], [0], [1], [0, 0, 1, 1], [], []>} : vector<8x32xf32>, vector<32x64xf32>, vector<8x64xf32> -> vector<8x64xf32>
    %32 = arith.addf %29, %31 : vector<8x64xf32>
    %cst_17 = arith.constant dense<0.000000e+00> : vector<64xf32>
    %33 = vector.multi_reduction <add>, %32, %cst_17 [0] : vector<8x64xf32> to vector<64xf32>
    %34 = vector.shape_cast %33 : vector<64xf32> to vector<1x64xf32>
    %cst_18 = arith.constant 8.000000e+00 : f32
    %35 = vector.broadcast %cst_18 : f32 to vector<1x64xf32>
    %36 = arith.divf %34, %35 : vector<1x64xf32>
    %37 = arith.mulf %32, %32 : vector<8x64xf32>
    %cst_19 = arith.constant dense<0.000000e+00> : vector<64xf32>
    %38 = vector.multi_reduction <add>, %37, %cst_19 [0] : vector<8x64xf32> to vector<64xf32>
    %39 = vector.shape_cast %38 : vector<64xf32> to vector<1x64xf32>
    %cst_20 = arith.constant 8.000000e+00 : f32
    %40 = vector.broadcast %cst_20 : f32 to vector<1x64xf32>
    %41 = arith.divf %39, %40 : vector<1x64xf32>
    %42 = arith.mulf %36, %36 : vector<1x64xf32>
    %43 = arith.subf %41, %42 : vector<1x64xf32>
    %c2 = arith.constant 2 : index
    %c0_21 = arith.constant 0 : index
    %44 = vector.load %arg4[%c2, %c0_21] : memref<5x64xf32, #tpu.memory_space<vmem>>, vector<1x64xf32>
    %c3 = arith.constant 3 : index
    %c0_22 = arith.constant 0 : index
    %45 = vector.load %arg4[%c3, %c0_22] : memref<5x64xf32, #tpu.memory_space<vmem>>, vector<1x64xf32>
    %cst_23 = arith.constant 9.99999974E-6 : f32
    %46 = vector.broadcast %cst_23 : f32 to vector<1x64xf32>
    %47 = arith.addf %43, %46 : vector<1x64xf32>
    %48 = math.rsqrt %47 : vector<1x64xf32>
    %49 = arith.mulf %44, %48 : vector<1x64xf32>
    %50 = arith.mulf %36, %49 : vector<1x64xf32>
    %51 = arith.subf %45, %50 : vector<1x64xf32>
    %52 = vector.broadcast %49 : vector<1x64xf32> to vector<8x64xf32>
    %53 = arith.mulf %32, %52 : vector<8x64xf32>
    %54 = vector.broadcast %51 : vector<1x64xf32> to vector<8x64xf32>
    %55 = arith.addf %53, %54 : vector<8x64xf32>
    %cst_24 = arith.constant 0.000000e+00 : f32
    %56 = vector.broadcast %cst_24 : f32 to vector<8x64xf32>
    %57 = arith.maximumf %55, %56 : vector<8x64xf32>
    %c0_25 = arith.constant 0 : index
    %c0_26 = arith.constant 0 : index
    %58 = vector.load %arg3[%c0_25, %c0_26] : memref<160x16xf32, #tpu.memory_space<vmem>>, vector<64x16xf32>
    %cst_27 = arith.constant dense<0.000000e+00> : vector<8x16xf32>
    %59 = tpu.matmul %57, %58, %cst_27 {dimension_numbers = #tpu.dot_dimension_numbers<[1], [0], [0], [1], [0, 0, 1, 1], [], []>} : vector<8x64xf32>, vector<64x16xf32>, vector<8x16xf32> -> vector<8x16xf32>
    %c64_28 = arith.constant 64 : index
    %c0_29 = arith.constant 0 : index
    %60 = vector.load %arg3[%c64_28, %c0_29] : memref<160x16xf32, #tpu.memory_space<vmem>>, vector<64x16xf32>
    %cst_30 = arith.constant dense<0.000000e+00> : vector<8x16xf32>
    %61 = tpu.matmul %27, %60, %cst_30 {dimension_numbers = #tpu.dot_dimension_numbers<[1], [0], [0], [1], [0, 0, 1, 1], [], []>} : vector<8x64xf32>, vector<64x16xf32>, vector<8x16xf32> -> vector<8x16xf32>
    %62 = arith.addf %59, %61 : vector<8x16xf32>
    %c128 = arith.constant 128 : index
    %c0_31 = arith.constant 0 : index
    %63 = vector.load %arg3[%c128, %c0_31] : memref<160x16xf32, #tpu.memory_space<vmem>>, vector<32x16xf32>
    %cst_32 = arith.constant dense<0.000000e+00> : vector<8x16xf32>
    %64 = tpu.matmul %0, %63, %cst_32 {dimension_numbers = #tpu.dot_dimension_numbers<[1], [0], [0], [1], [0, 0, 1, 1], [], []>} : vector<8x32xf32>, vector<32x16xf32>, vector<8x16xf32> -> vector<8x16xf32>
    %65 = arith.addf %62, %64 : vector<8x16xf32>
    %c4 = arith.constant 4 : index
    %c0_33 = arith.constant 0 : index
    %66 = vector.load %arg4[%c4, %c0_33] : memref<5x64xf32, #tpu.memory_space<vmem>>, vector<1x16xf32>
    %67 = vector.broadcast %66 : vector<1x16xf32> to vector<8x16xf32>
    %68 = arith.addf %65, %67 : vector<8x16xf32>
    %c0_34 = arith.constant 0 : index
    %c0_35 = arith.constant 0 : index
    %69 = vector.load %arg5[%c0_34, %c0_35] : memref<8x16xf32, #tpu.memory_space<vmem>>, vector<8x16xf32>
    tpu.vector_store %arg5[%c0_34, %c0_35], %68 {strides = array<i32>} : memref<8x16xf32, #tpu.memory_space<vmem>>, vector<8x16xf32>,
    return
  }
}

</mosaic_0001>

<llo_original>
// kernel: _lambda_.1
$region0: #{_lambda_.1}
  #allocation0 [shape = 'u32[]', space=smem, size = 0x4, offset = 0x4, fixed_abs, tag = 'smem constant byte address 0x4 - core index']
  #allocation1 [shape = 'u32[72,128]{1,0:T(1,128)}', space=vmem, size = 0x9000, scoped, tag = 'internal scratch']
  %s0 = inlined_call_operand.vmem [shape: f32[8,32], index: 0, kind: input, shape index: {}]
  %s1 = inlined_call_operand.vmem [shape: f32[32,64], index: 1, kind: input, shape index: {}]
  %s2 = inlined_call_operand.vmem [shape: f32[96,64], index: 2, kind: input, shape index: {}]
  %s3 = inlined_call_operand.vmem [shape: f32[160,16], index: 3, kind: input, shape index: {}]
  %s4 = inlined_call_operand.vmem [shape: f32[5,64], index: 4, kind: input, shape index: {}]
  %s5 = inlined_call_operand.hbm [shape: f32[8,16], index: 5, kind: output, shape index: {}]
  %s6 = sld [smem:[#allocation0]]
  $region30: #{_lambda_.1} parent=0
    _
  %s8 = ssub.s32 1, %s6
  %s9 = scalar_select 0, %s8, %s6
  $region1: #{_lambda_.1} parent=0
    #allocation2 [shape = 'u8[4096]{0}', space=vmem, size = 0x1000, scoped, tag = 'output window, operand 0, single buffered']
    #allocation3 [shape = 's32[1]{0}', space=sflag, size = 0x4, scoped, tag = 'scoped memory for _lambda_.1']
    %10 = vsyncpa [#allocation3], 0
    // Predicated region
    $region2: #{_lambda_.1} parent=1 // pred_check
      _
    $region3: #{_lambda_.1} parent=1 // pred_check_branch
      %12 = sbr.rel (0) target = $region5
    $region4: #{_lambda_.1} parent=1 // pred_region
      _
    $region5: #{_lambda_.1} parent=1 // pred_fallthru
      _
    // Predicated region
    $region6: #{_lambda_.1} parent=1 // pred_check
      _
    $region7: #{_lambda_.1} parent=1 // pred_check_branch
      %14 = sbr.rel (0) target = $region9
    $region8: #{_lambda_.1} parent=1 // pred_region
      _
    $region9: #{_lambda_.1} parent=1 // pred_fallthru
      _
    // Predicated region
    $region10: #{_lambda_.1} parent=1 // pred_check
      _
    $region11: #{_lambda_.1} parent=1 // pred_check_branch
      %16 = sbr.rel (0) target = $region13
    $region12: #{_lambda_.1} parent=1 // pred_region
      _
    $region13: #{_lambda_.1} parent=1 // pred_fallthru
      _
    // Predicated region
    $region14: #{_lambda_.1} parent=1 // pred_check
      _
    $region15: #{_lambda_.1} parent=1 // pred_check_branch
      %18 = sbr.rel (0) target = $region17
    $region16: #{_lambda_.1} parent=1 // pred_region
      _
    $region17: #{_lambda_.1} parent=1 // pred_fallthru
      _
    // Predicated region
    $region18: #{_lambda_.1} parent=1 // pred_check
      _
    $region19: #{_lambda_.1} parent=1 // pred_check_branch
      %20 = sbr.rel (0) target = $region21
    $region20: #{_lambda_.1} parent=1 // pred_region
      _
    $region21: #{_lambda_.1} parent=1 // pred_fallthru
      _
    %v21 = vld [vmem:[%s0] sm:$0xff]
    %v22 = vld [vmem:[%s1] sm:$0xff]
    %v23 = vld [vmem:[%s1 + $0x8] sm:$0xff]
    %v24 = vld [vmem:[%s1 + $0x10] sm:$0xff]
    %v25 = vld [vmem:[%s1 + $0x18] sm:$0xff]
    %vm26 = vcmask 261120
    %v28 = vsel %vm26, %v21, 0
    %30 = vmatpush.msra.mxu0 0.0
    %31 = vmatpush.msra.mxu0 0.0
    %32 = vmatpush.msra.mxu0 0.0
    %33 = vmatpush.msra.mxu0 0.0
    %34 = vmatpush.msra.mxu0 0.0
    %35 = vmatpush.msra.mxu0 0.0
    %36 = vmatpush.msra.mxu0 0.0
    %37 = vmatpush.msra.mxu0 0.0
    %38 = vmatpush.msra.mxu0 0.0
    %39 = vmatpush.msra.mxu0 0.0
    %40 = vmatpush.msra.mxu0 0.0
    %41 = vmatpush.msra.mxu0 0.0
    %42 = vmatpush.msra.mxu0 %v25
    %43 = vmatpush.msra.mxu0 %v24
    %44 = vmatpush.msra.mxu0 %v23
    %45 = vmatpush.msra.mxu0 %v22
    %46 = vmatmul.f32.gmra.mxu0 %v28
    %v47 = vpop.f32.mrf.mxu0
    %v48 = vadd.f32 0.0, %v47
    %49 = vdwg.mxu0
    %vm50 = vcmask 523264
    %v51 = vsel %vm50, %v48, 0.0
    %v52 = vrot.slane %v51, 4
    %v53 = vadd.f32 %v51, %v52
    %v54 = vrot.slane %v53, 2
    %v55 = vadd.f32 %v53, %v54
    %v56 = vrot.slane %v55, 1
    %v57 = vadd.f32 %v55, %v56
    %v58 = vrcp.pop 8.0
    %v59 = vmul.f32 8.0, %v58
    %v60 = vsub.f32 1.0, %v59
    %v61 = vmul.f32 %v58, %v60
    %v62 = vadd.f32 %v58, %v61
    %vm63 = vweird.f32 %v58
    %v64 = vsel %vm63, %v58, %v62
    %v65 = vmul.f32 %v57, %v64
    %v66 = vmul.f32 %v48, %v48
    %v67 = vsel %vm50, %v66, 0.0
    %v68 = vrot.slane %v67, 4
    %v69 = vadd.f32 %v67, %v68
    %v70 = vrot.slane %v69, 2
    %v71 = vadd.f32 %v69, %v70
    %v72 = vrot.slane %v71, 1
    %v73 = vadd.f32 %v71, %v72
    %v74 = vmul.f32 %v73, %v64
    %v75 = vmul.f32 %v65, %v65
    %v76 = vsub.f32 %v74, %v75
    %v77 = vld [vmem:[%s4] sm:$0x1]
    %v78 = vld [vmem:[%s4 + $0x1] sm:$0x1]
    %v79 = vadd.f32 %v76, 1e-05
    %v80 = vrsqrt.pop %v79
    %v81 = vmul.f32 %v80, %v79
    %v82 = vmul.f32 %v81, %v80
    %v83 = vmul.f32 0.5, %v82
    %v84 = vsub.f32 1.5, %v83
    %v85 = vmul.f32 %v80, %v84
    %vm86 = vweird.f32 %v79
    %vm87 = vweird.f32 %v80
    %vm88 = vmor %vm86, %vm87
    %v89 = vsel %vm88, %v80, %v85
    %v90 = vmul.f32 %v77, %v89
    %v91 = vmul.f32 %v65, %v90
    %v92 = vsub.f32 %v78, %v91
    %v93 = vperm.slane %v90, 0
    %v94 = vmul.f32 %v48, %v93
    %v95 = vperm.slane %v92, 0
    %v96 = vadd.f32 %v94, %v95
    %v97 = vmax.f32 %v96, 0.0
    %v98 = vld [vmem:[%s2] sm:$0xff]
    %v99 = vld [vmem:[%s2 + $0x8] sm:$0xff]
    %v100 = vld [vmem:[%s2 + $0x10] sm:$0xff]
    %v101 = vld [vmem:[%s2 + $0x18] sm:$0xff]
    %v102 = vld [vmem:[%s2 + $0x20] sm:$0xff]
    %v103 = vld [vmem:[%s2 + $0x28] sm:$0xff]
    %v104 = vld [vmem:[%s2 + $0x30] sm:$0xff]
    %v105 = vld [vmem:[%s2 + $0x38] sm:$0xff]
    %v106 = vld [vmem:[%s2 + $0x40] sm:$0xff]
    %v107 = vld [vmem:[%s2 + $0x48] sm:$0xff]
    %v108 = vld [vmem:[%s2 + $0x50] sm:$0xff]
    %v109 = vld [vmem:[%s2 + $0x58] sm:$0xff]
    %110 = vmatpush.msra.mxu0 0.0
    %111 = vmatpush.msra.mxu0 0.0
    %112 = vmatpush.msra.mxu0 0.0
    %113 = vmatpush.msra.mxu0 0.0
    %114 = vmatpush.msra.mxu0 0.0
    %115 = vmatpush.msra.mxu0 0.0
    %116 = vmatpush.msra.mxu0 0.0
    %117 = vmatpush.msra.mxu0 0.0
    %118 = vmatpush.msra.mxu0 0.0
    %119 = vmatpush.msra.mxu0 0.0
    %120 = vmatpush.msra.mxu0 0.0
    %121 = vmatpush.msra.mxu0 0.0
    %122 = vmatpush.msra.mxu0 %v109
    %123 = vmatpush.msra.mxu0 %v108
    %124 = vmatpush.msra.mxu0 %v107
    %125 = vmatpush.msra.mxu0 %v106
    %126 = vmatmul.f32.gmra.mxu0 %v28
    %v127 = vpop.f32.mrf.mxu0
    %v128 = vadd.f32 0.0, %v127
    %129 = vdwg.mxu0
    %v131 = vsel %vm50, %v97, 0
    %133 = vmatpush.msra.mxu0 0.0
    %134 = vmatpush.msra.mxu0 0.0
    %135 = vmatpush.msra.mxu0 0.0
    %136 = vmatpush.msra.mxu0 0.0
    %137 = vmatpush.msra.mxu0 0.0
    %138 = vmatpush.msra.mxu0 0.0
    %139 = vmatpush.msra.mxu0 0.0
    %140 = vmatpush.msra.mxu0 0.0
    %141 = vmatpush.msra.mxu0 %v105
    %142 = vmatpush.msra.mxu0 %v104
    %143 = vmatpush.msra.mxu0 %v103
    %144 = vmatpush.msra.mxu0 %v102
    %145 = vmatpush.msra.mxu0 %v101
    %146 = vmatpush.msra.mxu0 %v100
    %147 = vmatpush.msra.mxu0 %v99
    %148 = vmatpush.msra.mxu0 %v98
    %149 = vmatmul.f32.gmra.mxu0 %v131
    %v150 = vpop.f32.mrf.mxu0
    %v151 = vadd.f32 %v128, %v150
    %152 = vdwg.mxu0
    %v153 = vsel %vm50, %v151, 0.0
    %v154 = vrot.slane %v153, 4
    %v155 = vadd.f32 %v153, %v154
    %v156 = vrot.slane %v155, 2
    %v157 = vadd.f32 %v155, %v156
    %v158 = vrot.slane %v157, 1
    %v159 = vadd.f32 %v157, %v158
    %v160 = vmul.f32 %v159, %v64
    %v161 = vmul.f32 %v151, %v151
    %v162 = vsel %vm50, %v161, 0.0
    %v163 = vrot.slane %v162, 4
    %v164 = vadd.f32 %v162, %v163
    %v165 = vrot.slane %v164, 2
    %v166 = vadd.f32 %v164, %v165
    %v167 = vrot.slane %v166, 1
    %v168 = vadd.f32 %v166, %v167
    %v169 = vmul.f32 %v168, %v64
    %v170 = vmul.f32 %v160, %v160
    %v171 = vsub.f32 %v169, %v170
    %v172 = vld [vmem:[%s4 + $0x2] sm:$0x1]
    %v173 = vld [vmem:[%s4 + $0x3] sm:$0x1]
    %v174 = vadd.f32 %v171, 1e-05
    %v175 = vrsqrt.pop %v174
    %v176 = vmul.f32 %v175, %v174
    %v177 = vmul.f32 %v176, %v175
    %v178 = vmul.f32 0.5, %v177
    %v179 = vsub.f32 1.5, %v178
    %v180 = vmul.f32 %v175, %v179
    %vm181 = vweird.f32 %v174
    %vm182 = vweird.f32 %v175
    %vm183 = vmor %vm181, %vm182
    %v184 = vsel %vm183, %v175, %v180
    %v185 = vmul.f32 %v172, %v184
    %v186 = vmul.f32 %v160, %v185
    %v187 = vsub.f32 %v173, %v186
    %v188 = vperm.slane %v185, 0
    %v189 = vmul.f32 %v151, %v188
    %v190 = vperm.slane %v187, 0
    %v191 = vadd.f32 %v189, %v190
    %v192 = vmax.f32 %v191, 0.0
    %v193 = vld [vmem:[%s3] sm:$0xff]
    %v194 = vld [vmem:[%s3 + $0x8] sm:$0xff]
    %v195 = vld [vmem:[%s3 + $0x10] sm:$0xff]
    %v196 = vld [vmem:[%s3 + $0x18] sm:$0xff]
    %v197 = vld [vmem:[%s3 + $0x20] sm:$0xff]
    %v198 = vld [vmem:[%s3 + $0x28] sm:$0xff]
    %v199 = vld [vmem:[%s3 + $0x30] sm:$0xff]
    %v200 = vld [vmem:[%s3 + $0x38] sm:$0xff]
    %v201 = vld [vmem:[%s3 + $0x40] sm:$0xff]
    %v202 = vld [vmem:[%s3 + $0x48] sm:$0xff]
    %v203 = vld [vmem:[%s3 + $0x50] sm:$0xff]
    %v204 = vld [vmem:[%s3 + $0x58] sm:$0xff]
    %v205 = vld [vmem:[%s3 + $0x60] sm:$0xff]
    %v206 = vld [vmem:[%s3 + $0x68] sm:$0xff]
    %v207 = vld [vmem:[%s3 + $0x70] sm:$0xff]
    %v208 = vld [vmem:[%s3 + $0x78] sm:$0xff]
    %209 = vmatpush.msra.mxu0 0.0
    %210 = vmatpush.msra.mxu0 0.0
    %211 = vmatpush.msra.mxu0 0.0
    %212 = vmatpush.msra.mxu0 0.0
    %213 = vmatpush.msra.mxu0 0.0
    %214 = vmatpush.msra.mxu0 0.0
    %215 = vmatpush.msra.mxu0 0.0
    %216 = vmatpush.msra.mxu0 0.0
    %217 = vmatpush.msra.mxu0 %v208
    %218 = vmatpush.msra.mxu0 %v207
    %219 = vmatpush.msra.mxu0 %v206
    %220 = vmatpush.msra.mxu0 %v205
    %221 = vmatpush.msra.mxu0 %v204
    %222 = vmatpush.msra.mxu0 %v203
    %223 = vmatpush.msra.mxu0 %v202
    %224 = vmatpush.msra.mxu0 %v201
    %225 = vmatmul.f32.gmra.mxu0 %v131
    %v226 = vpop.f32.mrf.mxu0
    %v227 = vadd.f32 0.0, %v226
    %228 = vdwg.mxu0
    %v230 = vsel %vm50, %v192, 0
    %232 = vmatpush.msra.mxu0 0.0
    %233 = vmatpush.msra.mxu0 0.0
    %234 = vmatpush.msra.mxu0 0.0
    %235 = vmatpush.msra.mxu0 0.0
    %236 = vmatpush.msra.mxu0 0.0
    %237 = vmatpush.msra.mxu0 0.0
    %238 = vmatpush.msra.mxu0 0.0
    %239 = vmatpush.msra.mxu0 0.0
    %240 = vmatpush.msra.mxu0 %v200
    %241 = vmatpush.msra.mxu0 %v199
    %242 = vmatpush.msra.mxu0 %v198
    %243 = vmatpush.msra.mxu0 %v197
    %244 = vmatpush.msra.mxu0 %v196
    %245 = vmatpush.msra.mxu0 %v195
    %246 = vmatpush.msra.mxu0 %v194
    %247 = vmatpush.msra.mxu0 %v193
    %248 = vmatmul.f32.gmra.mxu0 %v230
    %v249 = vpop.f32.mrf.mxu0
    %v250 = vadd.f32 %v227, %v249
    %251 = vdwg.mxu0
    %v252 = vld [vmem:[%s3 + $0x80] sm:$0xff]
    %v253 = vld [vmem:[%s3 + $0x88] sm:$0xff]
    %v254 = vld [vmem:[%s3 + $0x90] sm:$0xff]
    %v255 = vld [vmem:[%s3 + $0x98] sm:$0xff]
    %256 = vmatpush.msra.mxu0 0.0
    %257 = vmatpush.msra.mxu0 0.0
    %258 = vmatpush.msra.mxu0 0.0
    %259 = vmatpush.msra.mxu0 0.0
    %260 = vmatpush.msra.mxu0 0.0
    %261 = vmatpush.msra.mxu0 0.0
    %262 = vmatpush.msra.mxu0 0.0
    %263 = vmatpush.msra.mxu0 0.0
    %264 = vmatpush.msra.mxu0 0.0
    %265 = vmatpush.msra.mxu0 0.0
    %266 = vmatpush.msra.mxu0 0.0
    %267 = vmatpush.msra.mxu0 0.0
    %268 = vmatpush.msra.mxu0 %v255
    %269 = vmatpush.msra.mxu0 %v254
    %270 = vmatpush.msra.mxu0 %v253
    %271 = vmatpush.msra.mxu0 %v252
    %272 = vmatmul.f32.gmra.mxu0 %v28
    %v273 = vpop.f32.mrf.mxu0
    %v274 = vadd.f32 0.0, %v273
    %275 = vdwg.mxu0
    %v276 = vadd.f32 %v250, %v274
    %v277 = vld [vmem:[%s4 + $0x4] sm:$0x1]
    %v278 = vperm.slane %v277, 0
    %v279 = vadd.f32 %v276, %v278
    %vm280 = vcmask 130048
    %281 = vst.msk [vmem:[#allocation2] sm:$0xff] %vm280, %v279
    // Predicated region
    $region22: #{_lambda_.1} parent=1 // pred_check
      _
    $region23: #{_lambda_.1} parent=1 // pred_check_branch
      %283 = sbr.rel (0) target = $region25
    $region24: #{_lambda_.1} parent=1 // pred_region
      %285 = vsyncadd [#allocation3], 0
      %s287 = sshll.u32 [#allocation2], 4
      %s288 = int_to_ptr.vmem [resolvable:$true] %s287
      %s289 = sshll.u32 %s5, 4
      %s290 = int_to_ptr.hbm [resolvable:$true] %s289
      %292 = dma.vmem_to_hbm [thread:$0]  %s288, 128, %s290, [#allocation3]
    $region25: #{_lambda_.1} parent=1 // pred_fallthru
      _
    // Predicated region
    $region26: #{_lambda_.1} parent=1 // pred_check
      _
    $region27: #{_lambda_.1} parent=1 // pred_check_branch
      %294 = sbr.rel (0) target = $region29
    $region28: #{_lambda_.1} parent=1 // pred_region
      %296 = dma.done [#allocation3], 128
    $region29: #{_lambda_.1} parent=1 // pred_fallthru
      _
    %297 = vsyncpa [#allocation3], 1

</llo_original>
